<compile_context>
chip_gen: v7x
topology: tpu7x:2x2x1
jax: 0.10.0
libtpu: 0.0.40
codegen_flags: <defaults>
</compile_context>

<pallas_src>
import jax
import jax.numpy as jnp
from jax import lax
from jax.experimental import pallas as pl
from jax.experimental.pallas import tpu as pltpu


# ----------------------------- Pallas kernel -----------------------------

def _build_kernel(h, w, hp, cout):
    """Fused transposed-conv (sub-pixel matmuls) + BN shift + ReLU + skip + ReLU.

    x1_ref   : (1, Wp*Hp, Cin)  bf16  column-major padded pixels (j major, i minor)
    w_ref    : (6, Cin, 2*Cout) bf16  per-(parity, tap) weight blocks, cols = (s, c)
    shift_ref: (1, 2*Cout)      f32   folded BN shift, tiled over s
    x2_ref   : (1, H, 4*W*Cout) f32   padded skip, lanes ordered (r, j, s, c)
    o_ref    : (1, H, 4*W*Cout) f32   same layout as x2
    acc_*_ref: (W*Hp, 2*Cout)   f32   VMEM scratch (matmul results per parity)
    """
    m = w * hp  # matmul rows: all pixels of the W real columns (+1 pad row each)

    def kernel(x1_ref, w_ref, shift_ref, x2_ref, o_ref, acc_e_ref, acc_o_ref):
        shift = shift_ref[...]                                # (1, 2*Cout)

        def tap(a, b):
            # 2x2-neighbourhood tap = sublane-offset slice of the padded block.
            off = a + b * hp
            return x1_ref[0, off:off + m, :]                  # (m, Cin) bf16

        def mm(t, a, b):
            return jnp.dot(tap(a, b), w_ref[t],
                           preferred_element_type=jnp.float32)

        # even output rows (r=0): only the a=0 taps contribute (ky=1)
        acc_e_ref[...] = mm(0, 0, 0) + mm(1, 0, 1) + shift
        # odd output rows (r=1): a=0 taps (ky=2) + a=1 taps (ky=0)
        acc_o_ref[...] = (mm(2, 0, 0) + mm(3, 0, 1)
                          + mm(4, 1, 0) + mm(5, 1, 1) + shift)

        def pieces(acc_ref):
            # drop the per-column pad row and move j (columns) into lanes:
            # (W*Hp, 2*Cout) -> W pieces of (H, 2*Cout)
            return [acc_ref[j * hp:j * hp + h, :] for j in range(w)]

        # lane order (r, j, s, c) -> one lane-dense (H, 4*W*Cout) slab  [R1, R4]
        y = jnp.concatenate(pieces(acc_e_ref) + pieces(acc_o_ref), axis=-1)
        y = jnp.maximum(y, 0.0)                               # ReLU after BN
        o_ref[0] = jnp.maximum(y + x2_ref[0], 0.0)            # + skip, ReLU

    return kernel


# ----------------------------- wrapper -----------------------------

def _rnd(a, b):
    return ((a + b - 1) // b) * b


def deconv_block_sum_forward(x1_nchw, x2_nchw, params):
    w_t = params["w_t"]        # (Cin, Cout, 3, 3)  ConvTranspose2d weight layout
    scale = params["scale"]    # (Cout,) folded eval-mode BN scale
    shift = params["shift"]    # (Cout,) folded eval-mode BN shift
    cin, cout, kh, kw = w_t.shape
    assert (kh, kw) == (3, 3), "only kernel=3 specialization implemented"

    n, cin_x, h, w = x1_nchw.shape
    assert cin_x == cin
    oh, ow = 2 * h, 2 * w
    owc = ow * cout            # lanes per row parity
    lanes_out = 2 * owc        # == 4*W*Cout, output lane width  [R1]
    hp, wp = h + 1, w + 2      # padded column height / number of columns

    # ---- x1: NCHW -> column-major padded pixel stream (one XLA copy)  [R2] ----
    # x1_cm[n, j*Hp + i, c] = x1[n, c, i, j] (zeros on the pad row/columns).
    x1 = jnp.transpose(x1_nchw, (0, 3, 2, 1)).astype(jnp.float32)   # (N, W, H, Cin)
    x1 = jnp.pad(x1, ((0, 0), (0, 2), (0, 1), (0, 0)))              # (N, Wp, Hp, Cin)
    x1_cm = x1.astype(jnp.bfloat16).reshape(n, wp * hp, cin)

    # ---- fold BN scale; build per-(parity, tap) weight blocks (Cin, 2*Cout) ----
    # y[2i+r, 2j+s] = sum_{a,b} x[i+a, j+b] @ W[:, :, ky(a,r), kx(b,s)]
    # with ky/kx(0,0)=1, (0,1)=2, (1,1)=0 and (1,0) contributing nothing.
    wf = w_t.astype(jnp.float32) * scale.astype(jnp.float32)[None, :, None, None]
    k_of = {(0, 0): 1, (0, 1): 2, (1, 1): 0}

    def col_block(ky, b):
        cols = [wf[:, :, ky, k_of[(b, s)]] if (b, s) in k_of
                else jnp.zeros((cin, cout), jnp.float32) for s in (0, 1)]
        return jnp.concatenate(cols, axis=1)                         # (Cin, 2*Cout)

    w_all = jnp.stack([col_block(1, 0), col_block(1, 1),             # even, a=0
                       col_block(2, 0), col_block(2, 1),             # odd,  a=0
                       col_block(0, 0), col_block(0, 1)],            # odd,  a=1
                      axis=0).astype(jnp.bfloat16)                   # (6, Cin, 2*Cout)
    shift2 = jnp.tile(shift.astype(jnp.float32), 2).reshape(1, 2 * cout)

    # ---- x2: F.pad + single transpose into the kernel's output layout  [R3] ----
    offset = oh - x2_nchw.shape[2]
    assert offset % 2 == 0, "odd skip-pad offset not handled"
    p = offset // 2
    x2 = x2_nchw.astype(jnp.float32)
    if p:
        x2 = jnp.pad(x2, ((0, 0), (0, 0), (p, p), (p, p)))
    x2p = (x2.reshape(n, cout, h, 2, w, 2)        # (n, c, i, r, j, s)
              .transpose(0, 2, 3, 4, 5, 1)        # (n, i, r, j, s, c)
              .reshape(n, h, lanes_out))

    # ---- generation-aware sizing: one image per step, check VMEM  [R6/R7] ----
    lane = 128
    x1_tile = _rnd(wp * hp, 8) * _rnd(cin, lane) * 2
    io_tile = _rnd(h, 8) * _rnd(lanes_out, lane) * 4          # x2 block == out block
    w_tile = 6 * _rnd(cin, 8) * _rnd(2 * cout, lane) * 2
    acc_tile = 2 * _rnd(w * hp, 8) * _rnd(2 * cout, lane) * 4
    vmem_est = 2 * (x1_tile + io_tile) + 2 * io_tile + w_tile + acc_tile
    assert vmem_est < 40 * 1024 * 1024, (
        "per-step VMEM footprint too large for v7x headroom; "
        "row/column tiling of the image needed (TODO)")

    kernel = _build_kernel(h, w, hp, cout)

    # Optional deeper pipelining on the streaming inputs when the grid is long
    # enough for it to matter (not at the 2-step test grid).  [R10]
    buffered = 3 if n >= 3 else None

    def spec(shape, imap, buf=None):
        if buf is None:
            return pl.BlockSpec(shape, imap)
        return pl.BlockSpec(shape, imap, pipeline_mode=pl.Buffered(buf))

    out = pl.pallas_call(
        kernel,
        out_shape=jax.ShapeDtypeStruct((n, h, lanes_out), jnp.float32),
        grid_spec=pltpu.PrefetchScalarGridSpec(
            num_scalar_prefetch=0,
            grid=(n,),                                   # >= 2 parallel steps [R7]
            in_specs=[
                spec((1, wp * hp, cin), lambda i: (i, 0, 0), buffered),
                spec((6, cin, 2 * cout), lambda i: (0, 0, 0)),
                spec((1, 2 * cout), lambda i: (0, 0)),
                spec((1, h, lanes_out), lambda i: (i, 0, 0), buffered),
            ],
            out_specs=pl.BlockSpec((1, h, lanes_out), lambda i: (i, 0, 0)),
            scratch_shapes=[pltpu.VMEM((w * hp, 2 * cout), jnp.float32),
                            pltpu.VMEM((w * hp, 2 * cout), jnp.float32)],
        ),
        compiler_params=pltpu.CompilerParams(
            dimension_semantics=("parallel",),
            vmem_limit_bytes=48 * 1024 * 1024,           # v7x-safe (64 MiB total)
        ),
    )(x1_cm, w_all, shift2, x2p)

    # Only metadata reshapes + ONE NCHW transpose remain outside the kernel  [R4]
    out = (out.reshape(n, h, 2, ow, cout)    # (n, i, r, ow, c)
              .transpose(0, 4, 1, 2, 3)      # (n, c, i, r, ow)
              .reshape(n, cout, oh, ow))
    return out


# ----------------------------- pure-JAX reference -----------------------------

def deconv_block_sum_reference(x1_nchw, x2_nchw, params):
    # ConvTranspose2d == lhs-dilated conv with the spatially flipped kernel.
    # Mirrors the kernel's bf16 operand rounding so the comparison is tight.
    w_t = params["w_t"].astype(jnp.float32)
    scale = params["scale"].astype(jnp.float32)
    shift = params["shift"].astype(jnp.float32)
    cin, cout, k, _ = w_t.shape
    wf = w_t * scale[None, :, None, None]
    w_hwio = jnp.transpose(wf[:, :, ::-1, ::-1], (2, 3, 0, 1))       # (kh,kw,Cin,Cout)

    x1 = jnp.transpose(x1_nchw, (0, 2, 3, 1)).astype(jnp.float32)
    x1 = x1.astype(jnp.bfloat16).astype(jnp.float32)
    w_hwio = w_hwio.astype(jnp.bfloat16).astype(jnp.float32)

    pad = k // 2
    lo = k - 1 - pad
    hi = k - 1 - pad + 1                                             # + output_padding
    y = lax.conv_general_dilated(
        x1, w_hwio, window_strides=(1, 1),
        padding=((lo, hi), (lo, hi)), lhs_dilation=(2, 2),
        dimension_numbers=("NHWC", "HWIO", "NHWC"),
        preferred_element_type=jnp.float32)
    y = jnp.maximum(y + shift, 0.0)

    offset = y.shape[1] - x2_nchw.shape[2]
    p = offset // 2
    x2 = jnp.transpose(x2_nchw, (0, 2, 3, 1)).astype(jnp.float32)
    if p:
        x2 = jnp.pad(x2, ((0, 0), (p, p), (p, p), (0, 0)))
    out = jnp.maximum(y + x2, 0.0)
    return jnp.transpose(out, (0, 3, 1, 2))


# ----------------------------- main -----------------------------

if __name__ == "__main__":
    # DeConvBlock_sum(in_size=4, out_size=4, kernel=3)
    # inputs1 NCHW (2, 4, 8, 8) -> upsampled to 16x16; inputs2 NCHW (2, 4, 16, 16)
    in_size, out_size, kernel = 4, 4, 3
    n, h, w = 2, 8, 8
    eps = 1e-5

    key = jax.random.PRNGKey(0)
    k1, k2, kw, kg, kb, km, kv = jax.random.split(key, 7)
    x1 = jax.random.normal(k1, (n, in_size, h, w), dtype=jnp.float32)
    x2 = jax.random.normal(k2, (n, out_size, 2 * h, 2 * w), dtype=jnp.float32)

    w_t = (jax.random.normal(kw, (in_size, out_size, kernel, kernel))
           * jnp.sqrt(2.0 / (kernel * kernel * in_size))).astype(jnp.float32)
    gamma = jax.random.uniform(kg, (out_size,), minval=0.5, maxval=1.5)
    beta = 0.1 * jax.random.normal(kb, (out_size,))
    mean = 0.1 * jax.random.normal(km, (out_size,))
    var = jax.random.uniform(kv, (out_size,), minval=0.5, maxval=1.5)
    scale = (gamma / jnp.sqrt(var + eps)).astype(jnp.float32)
    shift = (beta - mean * scale).astype(jnp.float32)
    params = dict(w_t=w_t, scale=scale, shift=shift)

    out = jax.jit(deconv_block_sum_forward)(x1, x2, params)
    out = jax.block_until_ready(out)
    assert out.shape == (n, out_size, 2 * h, 2 * w), out.shape

    ref = jax.block_until_ready(deconv_block_sum_reference(x1, x2, params))
    max_err = float(jnp.max(jnp.abs(out - ref)))
    assert jnp.allclose(out, ref, rtol=1e-3, atol=1e-3), max_err

    print("KERNEL_OK")
</pallas_src>

<mosaic_0001>
module attributes {stable_mosaic.version = 11 : i64} {
  func.func @kernel(%arg0: i32, %arg1: memref<1x90x4xbf16, #tpu.memory_space<vmem>>, %arg2: memref<6x4x8xbf16, #tpu.memory_space<vmem>>, %arg3: memref<1x8xf32, #tpu.memory_space<vmem>>, %arg4: memref<1x8x128xf32, #tpu.memory_space<vmem>>, %arg5: memref<1x8x128xf32, #tpu.memory_space<vmem>>, %arg6: memref<72x8xf32, #tpu.memory_space<vmem>>, %arg7: memref<72x8xf32, #tpu.memory_space<vmem>>) attributes {dimension_semantics = [#tpu.dimension_semantics<parallel>], iteration_bounds = array<i64: 2>, scalar_prefetch = 0 : i64, scratch_operands = 2 : i64, tpu.core_type = #tpu.core_type<tc>, window_params = [{transform_indices = @transform_0, window_bounds = array<i64: 1, 90, 4>}, {pipeline_mode = #tpu.pipeline_mode<synchronous>, transform_indices = @transform_1, window_bounds = array<i64: 6, 4, 8>}, {pipeline_mode = #tpu.pipeline_mode<synchronous>, transform_indices = @transform_2, window_bounds = array<i64: 1, 8>}, {transform_indices = @transform_3, window_bounds = array<i64: 1, 8, 128>}, {transform_indices = @transform_4, window_bounds = array<i64: 1, 8, 128>}]} {
    %c0 = arith.constant 0 : index
    %c0_0 = arith.constant 0 : index
    %0 = vector.load %arg3[%c0, %c0_0] : memref<1x8xf32, #tpu.memory_space<vmem>>, vector<1x8xf32>
    %c0_1 = arith.constant 0 : index
    %c0_2 = arith.constant 0 : index
    %c0_3 = arith.constant 0 : index
    %1 = vector.load %arg1[%c0_1, %c0_2, %c0_3] : memref<1x90x4xbf16, #tpu.memory_space<vmem>>, vector<1x72x4xbf16>
    %2 = vector.shape_cast %1 : vector<1x72x4xbf16> to vector<72x4xbf16>
    %c0_4 = arith.constant 0 : index
    %c0_5 = arith.constant 0 : index
    %c0_6 = arith.constant 0 : index
    %3 = vector.load %arg2[%c0_4, %c0_5, %c0_6] : memref<6x4x8xbf16, #tpu.memory_space<vmem>>, vector<1x4x8xbf16>
    %4 = vector.shape_cast %3 : vector<1x4x8xbf16> to vector<4x8xbf16>
    %cst = arith.constant dense<0.000000e+00> : vector<72x8xf32>
    %5 = tpu.matmul %2, %4, %cst {dimension_numbers = #tpu.dot_dimension_numbers<[1], [0], [0], [1], [0, 0, 1, 1], [], []>} : vector<72x4xbf16>, vector<4x8xbf16>, vector<72x8xf32> -> vector<72x8xf32>
    %c0_7 = arith.constant 0 : index
    %c9 = arith.constant 9 : index
    %c0_8 = arith.constant 0 : index
    %6 = vector.load %arg1[%c0_7, %c9, %c0_8] : memref<1x90x4xbf16, #tpu.memory_space<vmem>>, vector<1x72x4xbf16>
    %7 = vector.shape_cast %6 : vector<1x72x4xbf16> to vector<72x4xbf16>
    %c1 = arith.constant 1 : index
    %c0_9 = arith.constant 0 : index
    %c0_10 = arith.constant 0 : index
    %8 = vector.load %arg2[%c1, %c0_9, %c0_10] : memref<6x4x8xbf16, #tpu.memory_space<vmem>>, vector<1x4x8xbf16>
    %9 = vector.shape_cast %8 : vector<1x4x8xbf16> to vector<4x8xbf16>
    %cst_11 = arith.constant dense<0.000000e+00> : vector<72x8xf32>
    %10 = tpu.matmul %7, %9, %cst_11 {dimension_numbers = #tpu.dot_dimension_numbers<[1], [0], [0], [1], [0, 0, 1, 1], [], []>} : vector<72x4xbf16>, vector<4x8xbf16>, vector<72x8xf32> -> vector<72x8xf32>
    %11 = arith.addf %5, %10 : vector<72x8xf32>
    %12 = vector.broadcast %0 : vector<1x8xf32> to vector<72x8xf32>
    %13 = arith.addf %11, %12 : vector<72x8xf32>
    %c0_12 = arith.constant 0 : index
    %c0_13 = arith.constant 0 : index
    %14 = vector.load %arg6[%c0_12, %c0_13] : memref<72x8xf32, #tpu.memory_space<vmem>>, vector<72x8xf32>
    tpu.vector_store %arg6[%c0_12, %c0_13], %13 {strides = array<i32>} : memref<72x8xf32, #tpu.memory_space<vmem>>, vector<72x8xf32>,
    %c0_14 = arith.constant 0 : index
    %c0_15 = arith.constant 0 : index
    %c0_16 = arith.constant 0 : index
    %15 = vector.load %arg1[%c0_14, %c0_15, %c0_16] : memref<1x90x4xbf16, #tpu.memory_space<vmem>>, vector<1x72x4xbf16>
    %16 = vector.shape_cast %15 : vector<1x72x4xbf16> to vector<72x4xbf16>
    %c2 = arith.constant 2 : index
    %c0_17 = arith.constant 0 : index
    %c0_18 = arith.constant 0 : index
    %17 = vector.load %arg2[%c2, %c0_17, %c0_18] : memref<6x4x8xbf16, #tpu.memory_space<vmem>>, vector<1x4x8xbf16>
    %18 = vector.shape_cast %17 : vector<1x4x8xbf16> to vector<4x8xbf16>
    %cst_19 = arith.constant dense<0.000000e+00> : vector<72x8xf32>
    %19 = tpu.matmul %16, %18, %cst_19 {dimension_numbers = #tpu.dot_dimension_numbers<[1], [0], [0], [1], [0, 0, 1, 1], [], []>} : vector<72x4xbf16>, vector<4x8xbf16>, vector<72x8xf32> -> vector<72x8xf32>
    %c0_20 = arith.constant 0 : index
    %c9_21 = arith.constant 9 : index
    %c0_22 = arith.constant 0 : index
    %20 = vector.load %arg1[%c0_20, %c9_21, %c0_22] : memref<1x90x4xbf16, #tpu.memory_space<vmem>>, vector<1x72x4xbf16>
    %21 = vector.shape_cast %20 : vector<1x72x4xbf16> to vector<72x4xbf16>
    %c3 = arith.constant 3 : index
    %c0_23 = arith.constant 0 : index
    %c0_24 = arith.constant 0 : index
    %22 = vector.load %arg2[%c3, %c0_23, %c0_24] : memref<6x4x8xbf16, #tpu.memory_space<vmem>>, vector<1x4x8xbf16>
    %23 = vector.shape_cast %22 : vector<1x4x8xbf16> to vector<4x8xbf16>
    %cst_25 = arith.constant dense<0.000000e+00> : vector<72x8xf32>
    %24 = tpu.matmul %21, %23, %cst_25 {dimension_numbers = #tpu.dot_dimension_numbers<[1], [0], [0], [1], [0, 0, 1, 1], [], []>} : vector<72x4xbf16>, vector<4x8xbf16>, vector<72x8xf32> -> vector<72x8xf32>
    %25 = arith.addf %19, %24 : vector<72x8xf32>
    %c0_26 = arith.constant 0 : index
    %c1_27 = arith.constant 1 : index
    %c0_28 = arith.constant 0 : index
    %26 = vector.load %arg1[%c0_26, %c1_27, %c0_28] : memref<1x90x4xbf16, #tpu.memory_space<vmem>>, vector<1x72x4xbf16>
    %27 = vector.shape_cast %26 : vector<1x72x4xbf16> to vector<72x4xbf16>
    %c4 = arith.constant 4 : index
    %c0_29 = arith.constant 0 : index
    %c0_30 = arith.constant 0 : index
    %28 = vector.load %arg2[%c4, %c0_29, %c0_30] : memref<6x4x8xbf16, #tpu.memory_space<vmem>>, vector<1x4x8xbf16>
    %29 = vector.shape_cast %28 : vector<1x4x8xbf16> to vector<4x8xbf16>
    %cst_31 = arith.constant dense<0.000000e+00> : vector<72x8xf32>
    %30 = tpu.matmul %27, %29, %cst_31 {dimension_numbers = #tpu.dot_dimension_numbers<[1], [0], [0], [1], [0, 0, 1, 1], [], []>} : vector<72x4xbf16>, vector<4x8xbf16>, vector<72x8xf32> -> vector<72x8xf32>
    %31 = arith.addf %25, %30 : vector<72x8xf32>
    %c0_32 = arith.constant 0 : index
    %c10 = arith.constant 10 : index
    %c0_33 = arith.constant 0 : index
    %32 = vector.load %arg1[%c0_32, %c10, %c0_33] : memref<1x90x4xbf16, #tpu.memory_space<vmem>>, vector<1x72x4xbf16>
    %33 = vector.shape_cast %32 : vector<1x72x4xbf16> to vector<72x4xbf16>
    %c5 = arith.constant 5 : index
    %c0_34 = arith.constant 0 : index
    %c0_35 = arith.constant 0 : index
    %34 = vector.load %arg2[%c5, %c0_34, %c0_35] : memref<6x4x8xbf16, #tpu.memory_space<vmem>>, vector<1x4x8xbf16>
    %35 = vector.shape_cast %34 : vector<1x4x8xbf16> to vector<4x8xbf16>
    %cst_36 = arith.constant dense<0.000000e+00> : vector<72x8xf32>
    %36 = tpu.matmul %33, %35, %cst_36 {dimension_numbers = #tpu.dot_dimension_numbers<[1], [0], [0], [1], [0, 0, 1, 1], [], []>} : vector<72x4xbf16>, vector<4x8xbf16>, vector<72x8xf32> -> vector<72x8xf32>
    %37 = arith.addf %31, %36 : vector<72x8xf32>
    %38 = vector.broadcast %0 : vector<1x8xf32> to vector<72x8xf32>
    %39 = arith.addf %37, %38 : vector<72x8xf32>
    %c0_37 = arith.constant 0 : index
    %c0_38 = arith.constant 0 : index
    %40 = vector.load %arg7[%c0_37, %c0_38] : memref<72x8xf32, #tpu.memory_space<vmem>>, vector<72x8xf32>
    tpu.vector_store %arg7[%c0_37, %c0_38], %39 {strides = array<i32>} : memref<72x8xf32, #tpu.memory_space<vmem>>, vector<72x8xf32>,
    %c0_39 = arith.constant 0 : index
    %c0_40 = arith.constant 0 : index
    %41 = vector.load %arg6[%c0_39, %c0_40] : memref<72x8xf32, #tpu.memory_space<vmem>>, vector<8x8xf32>
    %c9_41 = arith.constant 9 : index
    %c0_42 = arith.constant 0 : index
    %42 = vector.load %arg6[%c9_41, %c0_42] : memref<72x8xf32, #tpu.memory_space<vmem>>, vector<8x8xf32>
    %c18 = arith.constant 18 : index
    %c0_43 = arith.constant 0 : index
    %43 = vector.load %arg6[%c18, %c0_43] : memref<72x8xf32, #tpu.memory_space<vmem>>, vector<8x8xf32>
    %c27 = arith.constant 27 : index
    %c0_44 = arith.constant 0 : index
    %44 = vector.load %arg6[%c27, %c0_44] : memref<72x8xf32, #tpu.memory_space<vmem>>, vector<8x8xf32>
    %c36 = arith.constant 36 : index
    %c0_45 = arith.constant 0 : index
    %45 = vector.load %arg6[%c36, %c0_45] : memref<72x8xf32, #tpu.memory_space<vmem>>, vector<8x8xf32>
    %c45 = arith.constant 45 : index
    %c0_46 = arith.constant 0 : index
    %46 = vector.load %arg6[%c45, %c0_46] : memref<72x8xf32, #tpu.memory_space<vmem>>, vector<8x8xf32>
    %c54 = arith.constant 54 : index
    %c0_47 = arith.constant 0 : index
    %47 = vector.load %arg6[%c54, %c0_47] : memref<72x8xf32, #tpu.memory_space<vmem>>, vector<8x8xf32>
    %c63 = arith.constant 63 : index
    %c0_48 = arith.constant 0 : index
    %48 = vector.load %arg6[%c63, %c0_48] : memref<72x8xf32, #tpu.memory_space<vmem>>, vector<8x8xf32>
    %c0_49 = arith.constant 0 : index
    %c0_50 = arith.constant 0 : index
    %49 = vector.load %arg7[%c0_49, %c0_50] : memref<72x8xf32, #tpu.memory_space<vmem>>, vector<8x8xf32>
    %c9_51 = arith.constant 9 : index
    %c0_52 = arith.constant 0 : index
    %50 = vector.load %arg7[%c9_51, %c0_52] : memref<72x8xf32, #tpu.memory_space<vmem>>, vector<8x8xf32>
    %c18_53 = arith.constant 18 : index
    %c0_54 = arith.constant 0 : index
    %51 = vector.load %arg7[%c18_53, %c0_54] : memref<72x8xf32, #tpu.memory_space<vmem>>, vector<8x8xf32>
    %c27_55 = arith.constant 27 : index
    %c0_56 = arith.constant 0 : index
    %52 = vector.load %arg7[%c27_55, %c0_56] : memref<72x8xf32, #tpu.memory_space<vmem>>, vector<8x8xf32>
    %c36_57 = arith.constant 36 : index
    %c0_58 = arith.constant 0 : index
    %53 = vector.load %arg7[%c36_57, %c0_58] : memref<72x8xf32, #tpu.memory_space<vmem>>, vector<8x8xf32>
    %c45_59 = arith.constant 45 : index
    %c0_60 = arith.constant 0 : index
    %54 = vector.load %arg7[%c45_59, %c0_60] : memref<72x8xf32, #tpu.memory_space<vmem>>, vector<8x8xf32>
    %c54_61 = arith.constant 54 : index
    %c0_62 = arith.constant 0 : index
    %55 = vector.load %arg7[%c54_61, %c0_62] : memref<72x8xf32, #tpu.memory_space<vmem>>, vector<8x8xf32>
    %c63_63 = arith.constant 63 : index
    %c0_64 = arith.constant 0 : index
    %56 = vector.load %arg7[%c63_63, %c0_64] : memref<72x8xf32, #tpu.memory_space<vmem>>, vector<8x8xf32>
    %57 = tpu.concatenate %41, %42, %43, %44, %45, %46, %47, %48, %49, %50, %51, %52, %53, %54, %55, %56 in 1 : vector<8x8xf32>, vector<8x8xf32>, vector<8x8xf32>, vector<8x8xf32>, vector<8x8xf32>, vector<8x8xf32>, vector<8x8xf32>, vector<8x8xf32>, vector<8x8xf32>, vector<8x8xf32>, vector<8x8xf32>, vector<8x8xf32>, vector<8x8xf32>, vector<8x8xf32>, vector<8x8xf32>, vector<8x8xf32> -> vector<8x128xf32>
    %cst_65 = arith.constant 0.000000e+00 : f32
    %58 = vector.broadcast %cst_65 : f32 to vector<8x128xf32>
    %59 = arith.maximumf %57, %58 : vector<8x128xf32>
    %c0_66 = arith.constant 0 : index
    %c0_67 = arith.constant 0 : index
    %c0_68 = arith.constant 0 : index
    %60 = vector.load %arg4[%c0_66, %c0_67, %c0_68] : memref<1x8x128xf32, #tpu.memory_space<vmem>>, vector<1x8x128xf32>
    %61 = vector.shape_cast %60 : vector<1x8x128xf32> to vector<8x128xf32>
    %62 = arith.addf %59, %61 : vector<8x128xf32>
    %cst_69 = arith.constant 0.000000e+00 : f32
    %63 = vector.broadcast %cst_69 : f32 to vector<8x128xf32>
    %64 = arith.maximumf %62, %63 : vector<8x128xf32>
    %c0_70 = arith.constant 0 : index
    %c0_71 = arith.constant 0 : index
    %c0_72 = arith.constant 0 : index
    %65 = vector.load %arg5[%c0_70, %c0_71, %c0_72] : memref<1x8x128xf32, #tpu.memory_space<vmem>>, vector<1x8x128xf32>
    %66 = vector.shape_cast %65 : vector<1x8x128xf32> to vector<8x128xf32>
    %67 = vector.shape_cast %64 : vector<8x128xf32> to vector<1x8x128xf32>
    tpu.vector_store %arg5[%c0_70, %c0_71, %c0_72], %67 {strides = array<i32>} : memref<1x8x128xf32, #tpu.memory_space<vmem>>, vector<1x8x128xf32>,
    return
  }
  func.func @transform_0(%arg0: i32) -> (i32, i32, i32) {
    %c0_i32 = arith.constant 0 : i32
    %c0_i32_0 = arith.constant 0 : i32
    %c0_i32_1 = arith.constant 0 : i32
    return %arg0, %c0_i32, %c0_i32_0 : i32, i32, i32
  }
  func.func @transform_1(%arg0: i32) -> (i32, i32, i32) {
    %c0_i32 = arith.constant 0 : i32
    %c0_i32_0 = arith.constant 0 : i32
    %c0_i32_1 = arith.constant 0 : i32
    %c0_i32_2 = arith.constant 0 : i32
    return %c0_i32, %c0_i32_0, %c0_i32_1 : i32, i32, i32
  }
  func.func @transform_2(%arg0: i32) -> (i32, i32) {
    %c0_i32 = arith.constant 0 : i32
    %c0_i32_0 = arith.constant 0 : i32
    %c0_i32_1 = arith.constant 0 : i32
    return %c0_i32, %c0_i32_0 : i32, i32
  }
  func.func @transform_3(%arg0: i32) -> (i32, i32, i32) {
    %c0_i32 = arith.constant 0 : i32
    %c0_i32_0 = arith.constant 0 : i32
    %c0_i32_1 = arith.constant 0 : i32
    return %arg0, %c0_i32, %c0_i32_0 : i32, i32, i32
  }
  func.func @transform_4(%arg0: i32) -> (i32, i32, i32) {
    %c0_i32 = arith.constant 0 : i32
    %c0_i32_0 = arith.constant 0 : i32
    %c0_i32_1 = arith.constant 0 : i32
    return %arg0, %c0_i32, %c0_i32_0 : i32, i32, i32
  }
}

</mosaic_0001>

<llo_original>
// kernel: tile.8
$region0: #{tile.8}
  #allocation0 [shape = 's32[1]{0}', space=sflag, size = 0x4, scoped, tag = 'scoped memory for tile.8']
  %s0 = inlined_call_operand.vmem [shape: f32[4], index: 0, kind: input, shape index: {}]
  %s1 = inlined_call_operand.vmem [shape: f32[2,4], index: 1, kind: output, shape index: {}]
  // Predicated region
  $region2: #{tile.8} parent=0 // pred_check
    _
  $region3: #{tile.8} parent=0 // pred_check_branch
    %3 = sbr.rel (0) target = $region5
  $region4: #{tile.8} parent=0 // pred_region
    _
  $region5: #{tile.8} parent=0 // pred_fallthru
    _
  %v4 = vld [vmem:[%s0] ss:$0 sm:$0xff]
  %5 = vst [vmem:[%s1] sm:$0x3] %v4

// kernel: tile.9
$region0: #{tile.9}
  %s0 = inlined_call_operand.vmem [shape: f32[2,4], index: 0, kind: input, shape index: {}]
  %s1 = inlined_call_operand.vmem [shape: f32[1,8], index: 1, kind: output, shape index: {}]
  $region1: #{tile.9} parent=0
    #allocation0 [shape = 'u8[4096]{0}', space=vmem, size = 0x1000, scoped, tag = 'scoped mem for output reshape']
    #allocation1 [shape = 'u8[4096]{0}', space=vmem, size = 0x1000, scoped, tag = 'scoped mem for input reshape']
    %s3 = sshllo.u32 0, 2
    %v4 = vld [vmem:[%s0] sm:%s3]
    %5 = vst [vmem:[#allocation1] sm:%s3] %v4
    %v6 = vld [vmem:[#allocation1] sm:$0x1]
    %vm7 = vcmask 31744
    %8 = vst.msk [vmem:[#allocation0] sm:$0x1] %vm7, %v6
    %s9 = scalar_lea.vmem [#allocation1], 1
    %v10 = vld [vmem:[%s9] sm:$0x1]
    %11 = vrot.lane.b32.xlu0 %v10, 4
    %v12 = vpop.permute.xlu0 %11
    %vm13 = vcmask 64544
    %14 = vst.msk [vmem:[#allocation0] sm:$0x1] %vm13, %v12
    %s16 = sshllo.u32 0, 1
    %v18 = vld [vmem:[#allocation0] sm:%s16]
    %s19 = sshllo.u32 0, 1
    %20 = vst [vmem:[%s1] sm:%s19] %v18

// kernel: deconv_block_sum_forward.1
$region0: #{deconv_block_sum_forward.1}
  #allocation0 [shape = 'u32[]', space=smem, size = 0x4, offset = 0x4, fixed_abs, tag = 'smem constant byte address 0x4 - core index']
  #allocation1 [shape = 'u32[144,128]{1,0:T(1,128)}', space=vmem, size = 0x12000, scoped, tag = 'internal scratch']
  #allocation2 [shape = 'f32[72,8]{1,0:T(8,128)}', space=vmem, size = 0x9000, scoped, tag = 'scratch operand']
  #allocation3 [shape = 'f32[72,8]{1,0:T(8,128)}', space=vmem, size = 0x9000, scoped, tag = 'scratch operand']
  %s0 = inlined_call_operand.vmem [shape: bf16[2,90,4], index: 0, kind: input, shape index: {}]
  %s1 = inlined_call_operand.vmem [shape: bf16[6,4,8], index: 1, kind: input, shape index: {}]
  %s2 = inlined_call_operand.vmem [shape: f32[1,8], index: 2, kind: input, shape index: {}]
  %s3 = inlined_call_operand.vmem [shape: f32[2,8,128], index: 3, kind: input, shape index: {}]
  %s4 = inlined_call_operand.vmem [shape: f32[2,8,128], index: 4, kind: output, shape index: {}]
  %s5 = sld [smem:[#allocation0]]
  $region49: #{deconv_block_sum_forward.1} parent=0
    _
  %s7 = ssub.s32 1, %s5
  %s8 = scalar_select 0, %s7, %s5
  loop: start=0, step=1, limit=4
  $region2: #{deconv_block_sum_forward.1} parent=0 // loop_pre_header
    _
  $region3: #{deconv_block_sum_forward.1} parent=0 // loop_header
    %s10 = sphi 0, %s14
    %p11 = scmp.ge.s32.totalorder %s10, 4
    %s20 = sphi 0, %s22
    %s23 = sphi 0, %s20
    %s24 = sphi 0, %s23
    %s40 = sphi 0, %s24
    %s44 = sphi 0, %s44
    %s46 = sphi 0, %s44
    %s47 = sphi 0, %s46
    %s61 = sphi 0, %s47
    %s65 = sphi 0, %s65
    %s67 = sphi 0, %s65
    %s68 = sphi 0, %s67
    %s82 = sphi 0, %s68
    %s88 = sphi 0, %s90
    %s91 = sphi 0, %s88
    %s92 = sphi 0, %s91
    %s108 = sphi 0, %s92
    %s114 = sphi 0, %s116
    %s117 = sphi 0, %s114
    %s118 = sphi 0, %s117
    %s134 = sphi 0, %s118
  $region4: #{deconv_block_sum_forward.1} parent=0 // loop_header_branch
    %13 = sbr.rel (%p11) target = $region8
  $region5: #{deconv_block_sum_forward.1} parent=0 // loop_body
    %s15 = ssub.s32 %s10, 1
    %s16 = ssub.s32 %s10, 2
    %s17 = sadd.s32 %s10, 1
    %s18 = ssub.s32 %s10, %s17
    %p19 = scmp.eq.s32.totalorder %s18, 0
    %s21 = sadd.s32 %s20, 1
    %s22 = scalar_select %p19, %s20, %s21
    %p25 = pneg %p19
    %p26 = scmp.eq.s32.totalorder %s10, 1
    %p27 = por %p25, %p26
    %p28 = scmp.ne.s32.totalorder %s20, %s23
    %p29 = scmp.eq.s32.totalorder %s10, 0
    %p30 = por %p28, %p29
    %p31 = scmp.ne.s32.totalorder %s20, %s23
    %p32 = scmp.eq.s32.totalorder %s15, 1
    %p33 = por %p31, %p32
    %p34 = scmp.ne.s32.totalorder %s23, %s24
    %p35 = scmp.eq.s32.totalorder %s15, 0
    %p36 = por %p34, %p35
    %p37 = scmp.ne.s32.totalorder %s23, %s24
    %p38 = scmp.eq.s32.totalorder %s16, 1
    %p39 = por %p37, %p38
    %p41 = scmp.ne.s32.totalorder %s24, %s40
    %p42 = scmp.eq.s32.totalorder %s16, 0
    %p43 = por %p41, %p42
    %s45 = sadd.s32 %s44, 1
    %p48 = scmp.eq.s32.totalorder %s10, 1
    %p49 = scmp.ne.s32.totalorder %s44, %s46
    %p50 = scmp.eq.s32.totalorder %s10, 0
    %p51 = por %p49, %p50
    %p52 = scmp.ne.s32.totalorder %s44, %s46
    %p53 = scmp.eq.s32.totalorder %s15, 1
    %p54 = por %p52, %p53
    %p55 = scmp.ne.s32.totalorder %s46, %s47
    %p56 = scmp.eq.s32.totalorder %s15, 0
    %p57 = por %p55, %p56
    %p58 = scmp.ne.s32.totalorder %s46, %s47
    %p59 = scmp.eq.s32.totalorder %s16, 1
    %p60 = por %p58, %p59
    %p62 = scmp.ne.s32.totalorder %s47, %s61
    %p63 = scmp.eq.s32.totalorder %s16, 0
    %p64 = por %p62, %p63
    %s66 = sadd.s32 %s65, 1
    %p69 = scmp.eq.s32.totalorder %s10, 1
    %p70 = scmp.ne.s32.totalorder %s65, %s67
    %p71 = scmp.eq.s32.totalorder %s10, 0
    %p72 = por %p70, %p71
    %p73 = scmp.ne.s32.totalorder %s65, %s67
    %p74 = scmp.eq.s32.totalorder %s15, 1
    %p75 = por %p73, %p74
    %p76 = scmp.ne.s32.totalorder %s67, %s68
    %p77 = scmp.eq.s32.totalorder %s15, 0
    %p78 = por %p76, %p77
    %p79 = scmp.ne.s32.totalorder %s67, %s68
    %p80 = scmp.eq.s32.totalorder %s16, 1
    %p81 = por %p79, %p80
    %p83 = scmp.ne.s32.totalorder %s68, %s82
    %p84 = scmp.eq.s32.totalorder %s16, 0
    %p85 = por %p83, %p84
    %s86 = ssub.s32 %s10, %s17
    %p87 = scmp.eq.s32.totalorder %s86, 0
    %s89 = sadd.s32 %s88, 1
    %s90 = scalar_select %p87, %s88, %s89
    %p93 = pneg %p87
    %p94 = scmp.eq.s32.totalorder %s10, 1
    %p95 = por %p93, %p94
    %p96 = scmp.ne.s32.totalorder %s88, %s91
    %p97 = scmp.eq.s32.totalorder %s10, 0
    %p98 = por %p96, %p97
    %p99 = scmp.ne.s32.totalorder %s88, %s91
    %p100 = scmp.eq.s32.totalorder %s15, 1
    %p101 = por %p99, %p100
    %p102 = scmp.ne.s32.totalorder %s91, %s92
    %p103 = scmp.eq.s32.totalorder %s15, 0
    %p104 = por %p102, %p103
    %p105 = scmp.ne.s32.totalorder %s91, %s92
    %p106 = scmp.eq.s32.totalorder %s16, 1
    %p107 = por %p105, %p106
    %p109 = scmp.ne.s32.totalorder %s92, %s108
    %p110 = scmp.eq.s32.totalorder %s16, 0
    %p111 = por %p109, %p110
    %s112 = ssub.s32 %s10, %s17
    %p113 = scmp.eq.s32.totalorder %s112, 0
    %s115 = sadd.s32 %s114, 1
    %s116 = scalar_select %p113, %s114, %s115
    %p119 = pneg %p113
    %p120 = scmp.eq.s32.totalorder %s10, 1
    %p121 = por %p119, %p120
    %p122 = scmp.ne.s32.totalorder %s114, %s117
    %p123 = scmp.eq.s32.totalorder %s10, 0
    %p124 = por %p122, %p123
    %p125 = scmp.ne.s32.totalorder %s114, %s117
    %p126 = scmp.eq.s32.totalorder %s15, 1
    %p127 = por %p125, %p126
    %p128 = scmp.ne.s32.totalorder %s117, %s118
    %p129 = scmp.eq.s32.totalorder %s15, 0
    %p130 = por %p128, %p129
    %p131 = scmp.ne.s32.totalorder %s117, %s118
    %p132 = scmp.eq.s32.totalorder %s16, 1
    %p133 = por %p131, %p132
    %p135 = scmp.ne.s32.totalorder %s118, %s134
    %p136 = scmp.eq.s32.totalorder %s16, 0
    %p137 = por %p135, %p136
    %p138 = scmp.le.s32.totalorder 1, %s10
    %p139 = scmp.lt.s32.totalorder %s10, 3
    %p140 = pnand %p138, %p139
    %p141 = pneg %p140
    // Predicated region
    $region9: #{deconv_block_sum_forward.1} parent=5 // pred_check
      _
    $region10: #{deconv_block_sum_forward.1} parent=5 // pred_check_branch
      %143 = sbr.rel (%p140) target = $region12
    $region11: #{deconv_block_sum_forward.1} parent=5 // pred_region
      %s144 = ssub.s32 %s10, 1
      // Predicated region
      $region13: #{deconv_block_sum_forward.1} parent=11 // pred_check
        %p145 = pneg %p57
      $region14: #{deconv_block_sum_forward.1} parent=11 // pred_check_branch
        %147 = sbr.rel (%p145) target = $region16
      $region15: #{deconv_block_sum_forward.1} parent=11 // pred_region
        _
      $region16: #{deconv_block_sum_forward.1} parent=11 // pred_fallthru
        _
      // Predicated region
      $region17: #{deconv_block_sum_forward.1} parent=11 // pred_check
        %p148 = pneg %p78
      $region18: #{deconv_block_sum_forward.1} parent=11 // pred_check_branch
        %150 = sbr.rel (%p148) target = $region20
      $region19: #{deconv_block_sum_forward.1} parent=11 // pred_region
        _
      $region20: #{deconv_block_sum_forward.1} parent=11 // pred_fallthru
        _
    $region12: #{deconv_block_sum_forward.1} parent=5 // pred_fallthru
      _
    %p151 = scmp.lt.s32.totalorder %s10, 2
    // Predicated region
    $region21: #{deconv_block_sum_forward.1} parent=5 // pred_check
      %p152 = pneg %p151
    $region22: #{deconv_block_sum_forward.1} parent=5 // pred_check_branch
      %154 = sbr.rel (%p152) target = $region24
    $region23: #{deconv_block_sum_forward.1} parent=5 // pred_region
      // Predicated region
      $region25: #{deconv_block_sum_forward.1} parent=23 // pred_check
        %p155 = pneg %p30
      $region26: #{deconv_block_sum_forward.1} parent=23 // pred_check_branch
        %157 = sbr.rel (%p155) target = $region28
      $region27: #{deconv_block_sum_forward.1} parent=23 // pred_region
        %p158 = scmp.lt.s32.totalorder %s10, 1
        %s159 = scalar_select %p158, %s10, 1
        %s160 = smul.addr %s159, 12
        %s161 = smul.addr %s160, 4
        %s162 = scalar_lea.vmem %s0, %s161
      $region28: #{deconv_block_sum_forward.1} parent=23 // pred_fallthru
        _
      // Predicated region
      $region29: #{deconv_block_sum_forward.1} parent=23 // pred_check
        %p163 = pneg %p98
      $region30: #{deconv_block_sum_forward.1} parent=23 // pred_check_branch
        %165 = sbr.rel (%p163) target = $region32
      $region31: #{deconv_block_sum_forward.1} parent=23 // pred_region
        %p166 = scmp.lt.s32.totalorder %s10, 1
        %s167 = scalar_select %p166, %s10, 1
        %s168 = smul.addr %s167, 8
        %s169 = scalar_lea.vmem %s3, %s168
      $region32: #{deconv_block_sum_forward.1} parent=23 // pred_fallthru
        _
    $region24: #{deconv_block_sum_forward.1} parent=5 // pred_fallthru
      _
    %p170 = scmp.le.s32.totalorder 1, %s10
    %p171 = scmp.lt.s32.totalorder %s10, 3
    %p172 = pnand %p170, %p171
    %p173 = pneg %p172
    // Predicated region
    $region33: #{deconv_block_sum_forward.1} parent=5 // pred_check
      _
    $region34: #{deconv_block_sum_forward.1} parent=5 // pred_check_branch
      %175 = sbr.rel (%p172) target = $region36
    $region35: #{deconv_block_sum_forward.1} parent=5 // pred_region
      %s176 = ssub.s32 %s10, 1
      %p177 = scmp.lt.s32.totalorder %s15, 1
      %s178 = scalar_select %p177, %s15, 1
      %s179 = smul.addr %s178, 12
      %s180 = smul.addr %s179, 4
      %s181 = scalar_lea.vmem %s0, %s180
      %p182 = pneg %p36
      %p183 = pneg %p33
      %p184 = pneg %p57
      %p185 = pneg %p54
      %p186 = pneg %p78
      %p187 = pneg %p75
      %p188 = scmp.lt.s32.totalorder %s15, 1
      %s189 = scalar_select %p188, %s15, 1
      %s190 = smul.addr %s189, 8
      %s191 = scalar_lea.vmem %s3, %s190
      %p192 = pneg %p104
      %p193 = pneg %p101
      %p194 = pneg %p130
      %p195 = pneg %p127
      %p196 = scmp.lt.s32.totalorder %s15, 1
      %s197 = scalar_select %p196, %s15, 1
      %s198 = smul.addr %s197, 8
      %s199 = scalar_lea.vmem %s4, %s198
      %p200 = scmp.lt.s32.totalorder %s15, 1
      %s201 = scalar_select %p200, %s15, 1
      %s202 = smul.addr %s201, 12
      %s203 = smul.addr %s202, 4
      %s204 = scalar_lea.vmem %s0, %s203
      %p205 = scmp.lt.s32.totalorder %s15, 1
      %s206 = scalar_select %p205, %s15, 1
      %s207 = smul.addr %s206, 8
      %s208 = scalar_lea.vmem %s3, %s207
      %p209 = scmp.lt.s32.totalorder %s15, 1
      %s210 = scalar_select %p209, %s15, 1
      %s211 = smul.addr %s210, 8
      %s212 = scalar_lea.vmem %s4, %s211
      %v214 = vld [vmem:[%s2] sm:$0x1]
      %v215 = vld [vmem:[%s204] sm:$0xf]
      %v216 = vld [vmem:[%s204 + $0x4] sm:$0xf]
      %v217 = vld [vmem:[%s204 + $0x8] sm:$0xf]
      %v218 = vld [vmem:[%s204 + $0xc] sm:$0xf]
      %v219 = vld [vmem:[%s204 + $0x10] sm:$0xf]
      %v220 = vld [vmem:[%s204 + $0x14] sm:$0xf]
      %v221 = vld [vmem:[%s204 + $0x18] sm:$0xf]
      %v222 = vld [vmem:[%s204 + $0x1c] sm:$0xf]
      %v223 = vld [vmem:[%s204 + $0x20] sm:$0xf]
      %v224 = vld [vmem:[%s1] sm:$0x3]
      %v225 = vld [vmem:[%s204 + $0x24] sm:$0xf]
      %v226 = vld [vmem:[%s204 + $0x28] sm:$0x1]
      %s227 = scalar_lea.vmem %s1, 2
      %v228 = vld [vmem:[%s227] sm:$0x3]
      %v239 = vunpack.c.l.b16 %v216
      %v240 = vunpack.c.l.b16 %v217
      %v241 = vunpack.c.l.b16 %v218
      %v242 = vunpack.c.l.b16 %v219
      %v243 = vunpack.c.l.b16 %v220
      %v244 = vunpack.c.l.b16 %v221
      %v245 = vunpack.c.l.b16 %v222
      %v246 = vunpack.c.l.b16 %v223
      %v247 = vunpack.c.l.b16 %v225
      %v248 = vunpack.c.l.b16 %v226
      %v249 = vpack.c.b16 %v240, %v239
      %v250 = vpack.c.b16 %v242, %v241
      %v251 = vpack.c.b16 %v244, %v243
      %v252 = vpack.c.b16 %v246, %v245
      %v253 = vpack.c.b16 %v248, %v247
      %vm254 = vsmask.f32 7424
      %v256 = vshrl.u32 %v249, 16
      %v258 = vshll.u32 %v249, 16
      %v260 = vrot.slane %v258, 1
      %v261 = vor.u32 %v256, %v260
      %v263 = vshll.u32 %v250, 16
      %v265 = vrot.slane %v263, 1
      %v266 = vsel %vm254, %v261, %v265
      %v267 = vshrl.u32 %v250, 16
      %v269 = vor.u32 %v267, %v265
      %v271 = vshll.u32 %v251, 16
      %v273 = vrot.slane %v271, 1
      %v274 = vsel %vm254, %v269, %v273
      %v275 = vshrl.u32 %v251, 16
      %v277 = vor.u32 %v275, %v273
      %v279 = vshll.u32 %v252, 16
      %v281 = vrot.slane %v279, 1
      %v282 = vsel %vm254, %v277, %v281
      %v283 = vshrl.u32 %v252, 16
      %v285 = vor.u32 %v283, %v281
      %v287 = vshll.u32 %v253, 16
      %v289 = vrot.slane %v287, 1
      %v290 = vsel %vm254, %v285, %v289
      %v291 = vshrl.u32 %v253, 16
      %v293 = vor.u32 %v291, %v289
      %vm294 = vcmask 31744
      %v296 = vsel %vm294, %v266, 0
      %v299 = vsel %vm294, %v274, 0
      %v302 = vsel %vm294, %v282, 0
      %v305 = vsel %vm294, %v290, 0
      %v308 = vsel %vm294, %v293, 0
      %vm310 = vcmask 1041408
      %v312 = vsel %vm310, %v228, 0
      %314 = vmatprep.subr.bf16.mxu0 0
      %315 = vmatpush1.bf16.msra.mxu0 %v312
      %316 = vmatprep.subr.bf16.mxu0 0
      %317 = vmatpush1.bf16.msra.mxu0 0
      %318 = vmatprep.subr.bf16.mxu0 0
      %319 = vmatpush1.bf16.msra.mxu0 0
      %320 = vmatprep.subr.bf16.mxu0 0
      %321 = vmatpush1.bf16.msra.mxu0 0
      %322 = vmatprep.subr.bf16.mxu0 0
      %323 = vmatpush1.bf16.msra.mxu0 0
      %324 = vmatprep.subr.bf16.mxu0 0
      %325 = vmatpush1.bf16.msra.mxu0 0
      %326 = vmatprep.subr.bf16.mxu0 0
      %327 = vmatpush1.bf16.msra.mxu0 0
      %328 = vmatprep.subr.bf16.mxu0 0
      %329 = vmatpush1.bf16.msra.mxu0 0
      %330 = vmatprep.subr.bf16.mxu0 0
      %331 = vmatpush1.bf16.msra.mxu0 0
      %332 = vmatprep.subr.bf16.mxu0 0
      %333 = vmatpush1.bf16.msra.mxu0 0
      %334 = vmatprep.subr.bf16.mxu0 0
      %335 = vmatpush1.bf16.msra.mxu0 0
      %336 = vmatprep.subr.bf16.mxu0 0
      %337 = vmatpush1.bf16.msra.mxu0 0
      %338 = vmatprep.subr.bf16.mxu0 0
      %339 = vmatpush1.bf16.msra.mxu0 0
      %340 = vmatprep.subr.bf16.mxu0 0
      %341 = vmatpush1.bf16.msra.mxu0 0
      %342 = vmatprep.subr.bf16.mxu0 0
      %343 = vmatpush1.bf16.msra.mxu0 0
      %344 = vmatprep.subr.bf16.mxu0 0
      %345 = vmatpush1.bf16.msra.mxu0 0
      %346 = vmatprep.mubr.bf16.mxu0 0
      %347 = vmatmul.mubr.bf16.gmra.mrb[0].mxu0 %v296
      %v348 = vpop.f32.mrb[0].mxu0
      %v349 = vadd.f32 0.0, %v348
      %v350 = vpop.f32.mrb[0].mxu0
      %v351 = vpop.f32.mrb[0].mxu0
      %v352 = vadd.f32 0.0, %v351
      %v353 = vpop.f32.mrb[0].mxu0
      %354 = vmatprep.mubr.bf16.mxu0 0
      %355 = vmatmul.mubr.bf16.gmra.mrb[0].mxu0 %v299
      %v356 = vpop.f32.mrb[0].mxu0
      %v357 = vadd.f32 0.0, %v356
      %v358 = vpop.f32.mrb[0].mxu0
      %v359 = vpop.f32.mrb[0].mxu0
      %v360 = vadd.f32 0.0, %v359
      %v361 = vpop.f32.mrb[0].mxu0
      %362 = vmatprep.mubr.bf16.mxu0 0
      %363 = vmatmul.mubr.bf16.gmra.mrb[0].mxu0 %v302
      %v364 = vpop.f32.mrb[0].mxu0
      %v365 = vadd.f32 0.0, %v364
      %v366 = vpop.f32.mrb[0].mxu0
      %v367 = vpop.f32.mrb[0].mxu0
      %v368 = vadd.f32 0.0, %v367
      %v369 = vpop.f32.mrb[0].mxu0
      %370 = vmatprep.mubr.bf16.mxu0 0
      %371 = vmatmul.mubr.bf16.gmra.mrb[0].mxu0 %v305
      %v372 = vpop.f32.mrb[0].mxu0
      %v373 = vadd.f32 0.0, %v372
      %v374 = vpop.f32.mrb[0].mxu0
      %v375 = vpop.f32.mrb[0].mxu0
      %v376 = vadd.f32 0.0, %v375
      %v377 = vpop.f32.mrb[0].mxu0
      %378 = vmatprep.mubr.bf16.mxu0 0
      %379 = vmatmul.mubr.bf16.gmra.mrb[0].mxu0 %v308
      %v380 = vpop.f32.mrb[0].mxu0
      %v381 = vadd.f32 0.0, %v380
      %v382 = vpop.f32.mrb[0].mxu0
      %v383 = vpop.f32.mrb[0].mxu0
      %v384 = vpop.f32.mrb[0].mxu0
      %385 = vdwg.mxu0
      %v387 = vunpack.c.l.b16 %v215
      %v388 = vpack.c.b16 %v239, %v387
      %v389 = vpack.c.b16 %v241, %v240
      %v390 = vpack.c.b16 %v243, %v242
      %v391 = vpack.c.b16 %v245, %v244
      %v392 = vpack.c.b16 %v246, %v246
      %v394 = vsel %vm294, %v388, 0
      %v397 = vsel %vm294, %v389, 0
      %v400 = vsel %vm294, %v390, 0
      %v403 = vsel %vm294, %v391, 0
      %v406 = vsel %vm294, %v392, 0
      %v409 = vsel %vm310, %v224, 0
      %411 = vmatprep.subr.bf16.mxu0 0
      %412 = vmatpush1.bf16.msra.mxu0 %v409
      %413 = vmatprep.subr.bf16.mxu0 0
      %414 = vmatpush1.bf16.msra.mxu0 0
      %415 = vmatprep.subr.bf16.mxu0 0
      %416 = vmatpush1.bf16.msra.mxu0 0
      %417 = vmatprep.subr.bf16.mxu0 0
      %418 = vmatpush1.bf16.msra.mxu0 0
      %419 = vmatprep.subr.bf16.mxu0 0
      %420 = vmatpush1.bf16.msra.mxu0 0
      %421 = vmatprep.subr.bf16.mxu0 0
      %422 = vmatpush1.bf16.msra.mxu0 0
      %423 = vmatprep.subr.bf16.mxu0 0
      %424 = vmatpush1.bf16.msra.mxu0 0
      %425 = vmatprep.subr.bf16.mxu0 0
      %426 = vmatpush1.bf16.msra.mxu0 0
      %427 = vmatprep.subr.bf16.mxu0 0
      %428 = vmatpush1.bf16.msra.mxu0 0
      %429 = vmatprep.subr.bf16.mxu0 0
      %430 = vmatpush1.bf16.msra.mxu0 0
      %431 = vmatprep.subr.bf16.mxu0 0
      %432 = vmatpush1.bf16.msra.mxu0 0
      %433 = vmatprep.subr.bf16.mxu0 0
      %434 = vmatpush1.bf16.msra.mxu0 0
      %435 = vmatprep.subr.bf16.mxu0 0
      %436 = vmatpush1.bf16.msra.mxu0 0
      %437 = vmatprep.subr.bf16.mxu0 0
      %438 = vmatpush1.bf16.msra.mxu0 0
      %439 = vmatprep.subr.bf16.mxu0 0
      %440 = vmatpush1.bf16.msra.mxu0 0
      %441 = vmatprep.subr.bf16.mxu0 0
      %442 = vmatpush1.bf16.msra.mxu0 0
      %443 = vmatprep.mubr.bf16.mxu0 0
      %444 = vmatmul.mubr.bf16.gmra.mrb[0].mxu0 %v394
      %v445 = vpop.f32.mrb[0].mxu0
      %v446 = vadd.f32 %v349, %v445
      %v447 = vpop.f32.mrb[0].mxu0
      %v448 = vpop.f32.mrb[0].mxu0
      %v449 = vadd.f32 %v352, %v448
      %v450 = vpop.f32.mrb[0].mxu0
      %451 = vmatprep.mubr.bf16.mxu0 0
      %452 = vmatmul.mubr.bf16.gmra.mrb[0].mxu0 %v397
      %v453 = vpop.f32.mrb[0].mxu0
      %v454 = vadd.f32 %v357, %v453
      %v455 = vpop.f32.mrb[0].mxu0
      %v456 = vpop.f32.mrb[0].mxu0
      %v457 = vadd.f32 %v360, %v456
      %v458 = vpop.f32.mrb[0].mxu0
      %459 = vmatprep.mubr.bf16.mxu0 0
      %460 = vmatmul.mubr.bf16.gmra.mrb[0].mxu0 %v400
      %v461 = vpop.f32.mrb[0].mxu0
      %v462 = vadd.f32 %v365, %v461
      %v463 = vpop.f32.mrb[0].mxu0
      %v464 = vpop.f32.mrb[0].mxu0
      %v465 = vadd.f32 %v368, %v464
      %v466 = vpop.f32.mrb[0].mxu0
      %467 = vmatprep.mubr.bf16.mxu0 0
      %468 = vmatmul.mubr.bf16.gmra.mrb[0].mxu0 %v403
      %v469 = vpop.f32.mrb[0].mxu0
      %v470 = vadd.f32 %v373, %v469
      %v471 = vpop.f32.mrb[0].mxu0
      %v472 = vpop.f32.mrb[0].mxu0
      %v473 = vadd.f32 %v376, %v472
      %v474 = vpop.f32.mrb[0].mxu0
      %475 = vmatprep.mubr.bf16.mxu0 0
      %476 = vmatmul.mubr.bf16.gmra.mrb[0].mxu0 %v406
      %v477 = vpop.f32.mrb[0].mxu0
      %v478 = vadd.f32 %v381, %v477
      %v479 = vpop.f32.mrb[0].mxu0
      %v480 = vpop.f32.mrb[0].mxu0
      %v481 = vpop.f32.mrb[0].mxu0
      %482 = vdwg.mxu0
      %v484 = vlaneseq
      %v485 = vshrl.u32 %v484, 7
      %v486 = vsub.s32 0, %v485
      %v487 = vrot.slane %v214, %v486
      %v489 = vadd.f32 %v446, %v487
      %v490 = vadd.f32 %v449, %v487
      %v491 = vadd.f32 %v454, %v487
      %v492 = vadd.f32 %v457, %v487
      %v493 = vadd.f32 %v462, %v487
      %v494 = vadd.f32 %v465, %v487
      %v495 = vadd.f32 %v470, %v487
      %v496 = vadd.f32 %v473, %v487
      %v497 = vadd.f32 %v478, %v487
      %vm498 = vcmask 64512
      %499 = vst.msk [vmem:[#allocation2] sm:$0xff] %vm498, %v489
      %500 = vst.msk [vmem:[#allocation2 + $0x8] sm:$0xff] %vm498, %v490
      %501 = vst.msk [vmem:[#allocation2 + $0x10] sm:$0xff] %vm498, %v491
      %502 = vst.msk [vmem:[#allocation2 + $0x18] sm:$0xff] %vm498, %v492
      %503 = vst.msk [vmem:[#allocation2 + $0x20] sm:$0xff] %vm498, %v493
      %504 = vst.msk [vmem:[#allocation2 + $0x28] sm:$0xff] %vm498, %v494
      %505 = vst.msk [vmem:[#allocation2 + $0x30] sm:$0xff] %vm498, %v495
      %506 = vst.msk [vmem:[#allocation2 + $0x38] sm:$0xff] %vm498, %v496
      %507 = vst.msk [vmem:[#allocation2 + $0x40] sm:$0xff] %vm498, %v497
      %v508 = vld [vmem:[%s204] sm:$0xf]
      %v509 = vld [vmem:[%s204 + $0x4] sm:$0xf]
      %v510 = vld [vmem:[%s204 + $0x8] sm:$0xf]
      %v511 = vld [vmem:[%s204 + $0xc] sm:$0xf]
      %v512 = vld [vmem:[%s204 + $0x10] sm:$0xf]
      %v513 = vld [vmem:[%s204 + $0x14] sm:$0xf]
      %v514 = vld [vmem:[%s204 + $0x18] sm:$0xf]
      %v515 = vld [vmem:[%s204 + $0x1c] sm:$0xf]
      %v516 = vld [vmem:[%s204 + $0x20] sm:$0xf]
      %s517 = scalar_lea.vmem %s1, 4
      %v518 = vld [vmem:[%s517] sm:$0x3]
      %v519 = vld [vmem:[%s204 + $0x24] sm:$0xf]
      %v520 = vld [vmem:[%s204 + $0x28] sm:$0x1]
      %s521 = scalar_lea.vmem %s1, 6
      %v522 = vld [vmem:[%s521] sm:$0x3]
      %v533 = vunpack.c.l.b16 %v509
      %v534 = vunpack.c.l.b16 %v510
      %v535 = vunpack.c.l.b16 %v511
      %v536 = vunpack.c.l.b16 %v512
      %v537 = vunpack.c.l.b16 %v513
      %v538 = vunpack.c.l.b16 %v514
      %v539 = vunpack.c.l.b16 %v515
      %v540 = vunpack.c.l.b16 %v516
      %v541 = vunpack.c.l.b16 %v519
      %v542 = vunpack.c.l.b16 %v520
      %v543 = vpack.c.b16 %v534, %v533
      %v544 = vpack.c.b16 %v536, %v535
      %v545 = vpack.c.b16 %v538, %v537
      %v546 = vpack.c.b16 %v540, %v539
      %v547 = vpack.c.b16 %v542, %v541
      %v549 = vshrl.u32 %v543, 16
      %v551 = vshll.u32 %v543, 16
      %v553 = vrot.slane %v551, 1
      %v554 = vor.u32 %v549, %v553
      %v556 = vshll.u32 %v544, 16
      %v558 = vrot.slane %v556, 1
      %v559 = vsel %vm254, %v554, %v558
      %v560 = vshrl.u32 %v544, 16
      %v562 = vor.u32 %v560, %v558
      %v564 = vshll.u32 %v545, 16
      %v566 = vrot.slane %v564, 1
      %v567 = vsel %vm254, %v562, %v566
      %v568 = vshrl.u32 %v545, 16
      %v570 = vor.u32 %v568, %v566
      %v572 = vshll.u32 %v546, 16
      %v574 = vrot.slane %v572, 1
      %v575 = vsel %vm254, %v570, %v574
      %v576 = vshrl.u32 %v546, 16
      %v578 = vor.u32 %v576, %v574
      %v580 = vshll.u32 %v547, 16
      %v582 = vrot.slane %v580, 1
      %v583 = vsel %vm254, %v578, %v582
      %v584 = vshrl.u32 %v547, 16
      %v586 = vor.u32 %v584, %v582
      %v588 = vsel %vm294, %v559, 0
      %v591 = vsel %vm294, %v567, 0
      %v594 = vsel %vm294, %v575, 0
      %v597 = vsel %vm294, %v583, 0
      %v600 = vsel %vm294, %v586, 0
      %v603 = vsel %vm310, %v522, 0
      %605 = vmatprep.subr.bf16.mxu0 0
      %606 = vmatpush1.bf16.msra.mxu0 %v603
      %607 = vmatprep.subr.bf16.mxu0 0
      %608 = vmatpush1.bf16.msra.mxu0 0
      %609 = vmatprep.subr.bf16.mxu0 0
      %610 = vmatpush1.bf16.msra.mxu0 0
      %611 = vmatprep.subr.bf16.mxu0 0
      %612 = vmatpush1.bf16.msra.mxu0 0
      %613 = vmatprep.subr.bf16.mxu0 0
      %614 = vmatpush1.bf16.msra.mxu0 0
      %615 = vmatprep.subr.bf16.mxu0 0
      %616 = vmatpush1.bf16.msra.mxu0 0
      %617 = vmatprep.subr.bf16.mxu0 0
      %618 = vmatpush1.bf16.msra.mxu0 0
      %619 = vmatprep.subr.bf16.mxu0 0
      %620 = vmatpush1.bf16.msra.mxu0 0
      %621 = vmatprep.subr.bf16.mxu0 0
      %622 = vmatpush1.bf16.msra.mxu0 0
      %623 = vmatprep.subr.bf16.mxu0 0
      %624 = vmatpush1.bf16.msra.mxu0 0
      %625 = vmatprep.subr.bf16.mxu0 0
      %626 = vmatpush1.bf16.msra.mxu0 0
      %627 = vmatprep.subr.bf16.mxu0 0
      %628 = vmatpush1.bf16.msra.mxu0 0
      %629 = vmatprep.subr.bf16.mxu0 0
      %630 = vmatpush1.bf16.msra.mxu0 0
      %631 = vmatprep.subr.bf16.mxu0 0
      %632 = vmatpush1.bf16.msra.mxu0 0
      %633 = vmatprep.subr.bf16.mxu0 0
      %634 = vmatpush1.bf16.msra.mxu0 0
      %635 = vmatprep.subr.bf16.mxu0 0
      %636 = vmatpush1.bf16.msra.mxu0 0
      %637 = vmatprep.mubr.bf16.mxu0 0
      %638 = vmatmul.mubr.bf16.gmra.mrb[0].mxu0 %v588
      %v639 = vpop.f32.mrb[0].mxu0
      %v640 = vadd.f32 0.0, %v639
      %v641 = vpop.f32.mrb[0].mxu0
      %v642 = vpop.f32.mrb[0].mxu0
      %v643 = vadd.f32 0.0, %v642
      %v644 = vpop.f32.mrb[0].mxu0
      %645 = vmatprep.mubr.bf16.mxu0 0
      %646 = vmatmul.mubr.bf16.gmra.mrb[0].mxu0 %v591
      %v647 = vpop.f32.mrb[0].mxu0
      %v648 = vadd.f32 0.0, %v647
      %v649 = vpop.f32.mrb[0].mxu0
      %v650 = vpop.f32.mrb[0].mxu0
      %v651 = vadd.f32 0.0, %v650
      %v652 = vpop.f32.mrb[0].mxu0
      %653 = vmatprep.mubr.bf16.mxu0 0
      %654 = vmatmul.mubr.bf16.gmra.mrb[0].mxu0 %v594
      %v655 = vpop.f32.mrb[0].mxu0
      %v656 = vadd.f32 0.0, %v655
      %v657 = vpop.f32.mrb[0].mxu0
      %v658 = vpop.f32.mrb[0].mxu0
      %v659 = vadd.f32 0.0, %v658
      %v660 = vpop.f32.mrb[0].mxu0
      %661 = vmatprep.mubr.bf16.mxu0 0
      %662 = vmatmul.mubr.bf16.gmra.mrb[0].mxu0 %v597
      %v663 = vpop.f32.mrb[0].mxu0
      %v664 = vadd.f32 0.0, %v663
      %v665 = vpop.f32.mrb[0].mxu0
      %v666 = vpop.f32.mrb[0].mxu0
      %v667 = vadd.f32 0.0, %v666
      %v668 = vpop.f32.mrb[0].mxu0
      %669 = vmatprep.mubr.bf16.mxu0 0
      %670 = vmatmul.mubr.bf16.gmra.mrb[0].mxu0 %v600
      %v671 = vpop.f32.mrb[0].mxu0
      %v672 = vadd.f32 0.0, %v671
      %v673 = vpop.f32.mrb[0].mxu0
      %v674 = vpop.f32.mrb[0].mxu0
      %v675 = vpop.f32.mrb[0].mxu0
      %676 = vdwg.mxu0
      %v678 = vunpack.c.l.b16 %v508
      %v679 = vpack.c.b16 %v533, %v678
      %v680 = vpack.c.b16 %v535, %v534
      %v681 = vpack.c.b16 %v537, %v536
      %v682 = vpack.c.b16 %v539, %v538
      %v683 = vpack.c.b16 %v540, %v540
      %v685 = vsel %vm294, %v679, 0
      %v688 = vsel %vm294, %v680, 0
      %v691 = vsel %vm294, %v681, 0
      %v694 = vsel %vm294, %v682, 0
      %v697 = vsel %vm294, %v683, 0
      %v700 = vsel %vm310, %v518, 0
      %702 = vmatprep.subr.bf16.mxu0 0
      %703 = vmatpush1.bf16.msra.mxu0 %v700
      %704 = vmatprep.subr.bf16.mxu0 0
      %705 = vmatpush1.bf16.msra.mxu0 0
      %706 = vmatprep.subr.bf16.mxu0 0
      %707 = vmatpush1.bf16.msra.mxu0 0
      %708 = vmatprep.subr.bf16.mxu0 0
      %709 = vmatpush1.bf16.msra.mxu0 0
      %710 = vmatprep.subr.bf16.mxu0 0
      %711 = vmatpush1.bf16.msra.mxu0 0
      %712 = vmatprep.subr.bf16.mxu0 0
      %713 = vmatpush1.bf16.msra.mxu0 0
      %714 = vmatprep.subr.bf16.mxu0 0
      %715 = vmatpush1.bf16.msra.mxu0 0
      %716 = vmatprep.subr.bf16.mxu0 0
      %717 = vmatpush1.bf16.msra.mxu0 0
      %718 = vmatprep.subr.bf16.mxu0 0
      %719 = vmatpush1.bf16.msra.mxu0 0
      %720 = vmatprep.subr.bf16.mxu0 0
      %721 = vmatpush1.bf16.msra.mxu0 0
      %722 = vmatprep.subr.bf16.mxu0 0
      %723 = vmatpush1.bf16.msra.mxu0 0
      %724 = vmatprep.subr.bf16.mxu0 0
      %725 = vmatpush1.bf16.msra.mxu0 0
      %726 = vmatprep.subr.bf16.mxu0 0
      %727 = vmatpush1.bf16.msra.mxu0 0
      %728 = vmatprep.subr.bf16.mxu0 0
      %729 = vmatpush1.bf16.msra.mxu0 0
      %730 = vmatprep.subr.bf16.mxu0 0
      %731 = vmatpush1.bf16.msra.mxu0 0
      %732 = vmatprep.subr.bf16.mxu0 0
      %733 = vmatpush1.bf16.msra.mxu0 0
      %734 = vmatprep.mubr.bf16.mxu0 0
      %735 = vmatmul.mubr.bf16.gmra.mrb[0].mxu0 %v685
      %v736 = vpop.f32.mrb[0].mxu0
      %v737 = vadd.f32 %v640, %v736
      %v738 = vpop.f32.mrb[0].mxu0
      %v739 = vpop.f32.mrb[0].mxu0
      %v740 = vadd.f32 %v643, %v739
      %v741 = vpop.f32.mrb[0].mxu0
      %742 = vmatprep.mubr.bf16.mxu0 0
      %743 = vmatmul.mubr.bf16.gmra.mrb[0].mxu0 %v688
      %v744 = vpop.f32.mrb[0].mxu0
      %v745 = vadd.f32 %v648, %v744
      %v746 = vpop.f32.mrb[0].mxu0
      %v747 = vpop.f32.mrb[0].mxu0
      %v748 = vadd.f32 %v651, %v747
      %v749 = vpop.f32.mrb[0].mxu0
      %750 = vmatprep.mubr.bf16.mxu0 0
      %751 = vmatmul.mubr.bf16.gmra.mrb[0].mxu0 %v691
      %v752 = vpop.f32.mrb[0].mxu0
      %v753 = vadd.f32 %v656, %v752
      %v754 = vpop.f32.mrb[0].mxu0
      %v755 = vpop.f32.mrb[0].mxu0
      %v756 = vadd.f32 %v659, %v755
      %v757 = vpop.f32.mrb[0].mxu0
      %758 = vmatprep.mubr.bf16.mxu0 0
      %759 = vmatmul.mubr.bf16.gmra.mrb[0].mxu0 %v694
      %v760 = vpop.f32.mrb[0].mxu0
      %v761 = vadd.f32 %v664, %v760
      %v762 = vpop.f32.mrb[0].mxu0
      %v763 = vpop.f32.mrb[0].mxu0
      %v764 = vadd.f32 %v667, %v763
      %v765 = vpop.f32.mrb[0].mxu0
      %766 = vmatprep.mubr.bf16.mxu0 0
      %767 = vmatmul.mubr.bf16.gmra.mrb[0].mxu0 %v697
      %v768 = vpop.f32.mrb[0].mxu0
      %v769 = vadd.f32 %v672, %v768
      %v770 = vpop.f32.mrb[0].mxu0
      %v771 = vpop.f32.mrb[0].mxu0
      %v772 = vpop.f32.mrb[0].mxu0
      %773 = vdwg.mxu0
      %v774 = vld [vmem:[%s204] sm:$0xf]
      %v775 = vld [vmem:[%s204 + $0x4] sm:$0xf]
      %v776 = vld [vmem:[%s204 + $0x8] sm:$0xf]
      %v777 = vld [vmem:[%s204 + $0xc] sm:$0xf]
      %v778 = vld [vmem:[%s204 + $0x10] sm:$0xf]
      %v779 = vld [vmem:[%s204 + $0x14] sm:$0xf]
      %v780 = vld [vmem:[%s204 + $0x18] sm:$0xf]
      %v781 = vld [vmem:[%s204 + $0x1c] sm:$0xf]
      %v782 = vld [vmem:[%s204 + $0x20] sm:$0xf]
      %v783 = vld [vmem:[%s204 + $0x24] sm:$0x1]
      %s784 = scalar_lea.vmem %s1, 8
      %v785 = vld [vmem:[%s784] sm:$0x3]
      %v796 = vunpack.c.l.b16 %v774
      %v797 = vunpack.c.l.b16 %v775
      %v798 = vunpack.c.l.b16 %v776
      %v799 = vunpack.c.l.b16 %v777
      %v800 = vunpack.c.l.b16 %v778
      %v801 = vunpack.c.l.b16 %v779
      %v802 = vunpack.c.l.b16 %v780
      %v803 = vunpack.c.l.b16 %v781
      %v804 = vunpack.c.l.b16 %v782
      %v805 = vunpack.c.l.b16 %v783
      %v806 = vpack.c.b16 %v797, %v796
      %v807 = vpack.c.b16 %v799, %v798
      %v808 = vpack.c.b16 %v801, %v800
      %v809 = vpack.c.b16 %v803, %v802
      %v810 = vpack.c.b16 %v805, %v804
      %v812 = vshrl.u32 %v806, 16
      %v814 = vshll.u32 %v806, 16
      %v816 = vrot.slane %v814, 1
      %v817 = vor.u32 %v812, %v816
      %v819 = vshll.u32 %v807, 16
      %v821 = vrot.slane %v819, 1
      %v822 = vsel %vm254, %v817, %v821
      %v823 = vshrl.u32 %v807, 16
      %v825 = vor.u32 %v823, %v821
      %v827 = vshll.u32 %v808, 16
      %v829 = vrot.slane %v827, 1
      %v830 = vsel %vm254, %v825, %v829
      %v831 = vshrl.u32 %v808, 16
      %v833 = vor.u32 %v831, %v829
      %v835 = vshll.u32 %v809, 16
      %v837 = vrot.slane %v835, 1
      %v838 = vsel %vm254, %v833, %v837
      %v839 = vshrl.u32 %v809, 16
      %v841 = vor.u32 %v839, %v837
      %v843 = vshll.u32 %v810, 16
      %v845 = vrot.slane %v843, 1
      %v846 = vsel %vm254, %v841, %v845
      %v847 = vshrl.u32 %v810, 16
      %v849 = vor.u32 %v847, %v845
      %v851 = vsel %vm294, %v822, 0
      %v854 = vsel %vm294, %v830, 0
      %v857 = vsel %vm294, %v838, 0
      %v860 = vsel %vm294, %v846, 0
      %v863 = vsel %vm294, %v849, 0
      %v866 = vsel %vm310, %v785, 0
      %868 = vmatprep.subr.bf16.mxu0 0
      %869 = vmatpush1.bf16.msra.mxu0 %v866
      %870 = vmatprep.subr.bf16.mxu0 0
      %871 = vmatpush1.bf16.msra.mxu0 0
      %872 = vmatprep.subr.bf16.mxu0 0
      %873 = vmatpush1.bf16.msra.mxu0 0
      %874 = vmatprep.subr.bf16.mxu0 0
      %875 = vmatpush1.bf16.msra.mxu0 0
      %876 = vmatprep.subr.bf16.mxu0 0
      %877 = vmatpush1.bf16.msra.mxu0 0
      %878 = vmatprep.subr.bf16.mxu0 0
      %879 = vmatpush1.bf16.msra.mxu0 0
      %880 = vmatprep.subr.bf16.mxu0 0
      %881 = vmatpush1.bf16.msra.mxu0 0
      %882 = vmatprep.subr.bf16.mxu0 0
      %883 = vmatpush1.bf16.msra.mxu0 0
      %884 = vmatprep.subr.bf16.mxu0 0
      %885 = vmatpush1.bf16.msra.mxu0 0
      %886 = vmatprep.subr.bf16.mxu0 0
      %887 = vmatpush1.bf16.msra.mxu0 0
      %888 = vmatprep.subr.bf16.mxu0 0
      %889 = vmatpush1.bf16.msra.mxu0 0
      %890 = vmatprep.subr.bf16.mxu0 0
      %891 = vmatpush1.bf16.msra.mxu0 0
      %892 = vmatprep.subr.bf16.mxu0 0
      %893 = vmatpush1.bf16.msra.mxu0 0
      %894 = vmatprep.subr.bf16.mxu0 0
      %895 = vmatpush1.bf16.msra.mxu0 0
      %896 = vmatprep.subr.bf16.mxu0 0
      %897 = vmatpush1.bf16.msra.mxu0 0
      %898 = vmatprep.subr.bf16.mxu0 0
      %899 = vmatpush1.bf16.msra.mxu0 0
      %900 = vmatprep.mubr.bf16.mxu0 0
      %901 = vmatmul.mubr.bf16.gmra.mrb[0].mxu0 %v851
      %v902 = vpop.f32.mrb[0].mxu0
      %v903 = vadd.f32 0.0, %v902
      %v904 = vpop.f32.mrb[0].mxu0
      %v905 = vpop.f32.mrb[0].mxu0
      %v906 = vadd.f32 0.0, %v905
      %v907 = vpop.f32.mrb[0].mxu0
      %908 = vmatprep.mubr.bf16.mxu0 0
      %909 = vmatmul.mubr.bf16.gmra.mrb[0].mxu0 %v854
      %v910 = vpop.f32.mrb[0].mxu0
      %v911 = vadd.f32 0.0, %v910
      %v912 = vpop.f32.mrb[0].mxu0
      %v913 = vpop.f32.mrb[0].mxu0
      %v914 = vadd.f32 0.0, %v913
      %v915 = vpop.f32.mrb[0].mxu0
      %916 = vmatprep.mubr.bf16.mxu0 0
      %917 = vmatmul.mubr.bf16.gmra.mrb[0].mxu0 %v857
      %v918 = vpop.f32.mrb[0].mxu0
      %v919 = vadd.f32 0.0, %v918
      %v920 = vpop.f32.mrb[0].mxu0
      %v921 = vpop.f32.mrb[0].mxu0
      %v922 = vadd.f32 0.0, %v921
      %v923 = vpop.f32.mrb[0].mxu0
      %924 = vmatprep.mubr.bf16.mxu0 0
      %925 = vmatmul.mubr.bf16.gmra.mrb[0].mxu0 %v860
      %v926 = vpop.f32.mrb[0].mxu0
      %v927 = vadd.f32 0.0, %v926
      %v928 = vpop.f32.mrb[0].mxu0
      %v929 = vpop.f32.mrb[0].mxu0
      %v930 = vadd.f32 0.0, %v929
      %v931 = vpop.f32.mrb[0].mxu0
      %932 = vmatprep.mubr.bf16.mxu0 0
      %933 = vmatmul.mubr.bf16.gmra.mrb[0].mxu0 %v863
      %v934 = vpop.f32.mrb[0].mxu0
      %v935 = vadd.f32 0.0, %v934
      %v936 = vpop.f32.mrb[0].mxu0
      %v937 = vpop.f32.mrb[0].mxu0
      %v938 = vpop.f32.mrb[0].mxu0
      %939 = vdwg.mxu0
      %v940 = vadd.f32 %v737, %v903
      %v941 = vadd.f32 %v740, %v906
      %v942 = vadd.f32 %v745, %v911
      %v943 = vadd.f32 %v748, %v914
      %v944 = vadd.f32 %v753, %v919
      %v945 = vadd.f32 %v756, %v922
      %v946 = vadd.f32 %v761, %v927
      %v947 = vadd.f32 %v764, %v930
      %v948 = vadd.f32 %v769, %v935
      %v949 = vld [vmem:[%s204 + $0x4] sm:$0xe]
      %s950 = scalar_lea.vmem %s1, 10
      %v951 = vld [vmem:[%s950] sm:$0x3]
      %v953 = vunpack.c.l.b16 %v949
      %v954 = vpack.c.b16 %v534, %v953
      %vm955 = vcmask 1046528
      %v956 = vrot.slane %v954, 1
      %v957 = vrot.slane %v544, 1
      %v958 = vsel %vm955, %v956, %v957
      %v959 = vrot.slane %v545, 1
      %v960 = vsel %vm955, %v957, %v959
      %v961 = vrot.slane %v546, 1
      %v962 = vsel %vm955, %v959, %v961
      %v963 = vrot.slane %v547, 1
      %v964 = vsel %vm955, %v961, %v963
      %v966 = vsel %vm294, %v958, 0
      %v969 = vsel %vm294, %v960, 0
      %v972 = vsel %vm294, %v962, 0
      %v975 = vsel %vm294, %v964, 0
      %v978 = vsel %vm294, %v963, 0
      %v981 = vsel %vm310, %v951, 0
      %983 = vmatprep.subr.bf16.mxu0 0
      %984 = vmatpush1.bf16.msra.mxu0 %v981
      %985 = vmatprep.subr.bf16.mxu0 0
      %986 = vmatpush1.bf16.msra.mxu0 0
      %987 = vmatprep.subr.bf16.mxu0 0
      %988 = vmatpush1.bf16.msra.mxu0 0
      %989 = vmatprep.subr.bf16.mxu0 0
      %990 = vmatpush1.bf16.msra.mxu0 0
      %991 = vmatprep.subr.bf16.mxu0 0
      %992 = vmatpush1.bf16.msra.mxu0 0
      %993 = vmatprep.subr.bf16.mxu0 0
      %994 = vmatpush1.bf16.msra.mxu0 0
      %995 = vmatprep.subr.bf16.mxu0 0
      %996 = vmatpush1.bf16.msra.mxu0 0
      %997 = vmatprep.subr.bf16.mxu0 0
      %998 = vmatpush1.bf16.msra.mxu0 0
      %999 = vmatprep.subr.bf16.mxu0 0
      %1000 = vmatpush1.bf16.msra.mxu0 0
      %1001 = vmatprep.subr.bf16.mxu0 0
      %1002 = vmatpush1.bf16.msra.mxu0 0
      %1003 = vmatprep.subr.bf16.mxu0 0
      %1004 = vmatpush1.bf16.msra.mxu0 0
      %1005 = vmatprep.subr.bf16.mxu0 0
      %1006 = vmatpush1.bf16.msra.mxu0 0
      %1007 = vmatprep.subr.bf16.mxu0 0
      %1008 = vmatpush1.bf16.msra.mxu0 0
      %1009 = vmatprep.subr.bf16.mxu0 0
      %1010 = vmatpush1.bf16.msra.mxu0 0
      %1011 = vmatprep.subr.bf16.mxu0 0
      %1012 = vmatpush1.bf16.msra.mxu0 0
      %1013 = vmatprep.subr.bf16.mxu0 0
      %1014 = vmatpush1.bf16.msra.mxu0 0
      %1015 = vmatprep.mubr.bf16.mxu0 0
      %1016 = vmatmul.mubr.bf16.gmra.mrb[0].mxu0 %v966
      %v1017 = vpop.f32.mrb[0].mxu0
      %v1018 = vadd.f32 0.0, %v1017
      %v1019 = vpop.f32.mrb[0].mxu0
      %v1020 = vpop.f32.mrb[0].mxu0
      %v1021 = vadd.f32 0.0, %v1020
      %v1022 = vpop.f32.mrb[0].mxu0
      %1023 = vmatprep.mubr.bf16.mxu0 0
      %1024 = vmatmul.mubr.bf16.gmra.mrb[0].mxu0 %v969
      %v1025 = vpop.f32.mrb[0].mxu0
      %v1026 = vadd.f32 0.0, %v1025
      %v1027 = vpop.f32.mrb[0].mxu0
      %v1028 = vpop.f32.mrb[0].mxu0
      %v1029 = vadd.f32 0.0, %v1028
      %v1030 = vpop.f32.mrb[0].mxu0
      %1031 = vmatprep.mubr.bf16.mxu0 0
      %1032 = vmatmul.mubr.bf16.gmra.mrb[0].mxu0 %v972
      %v1033 = vpop.f32.mrb[0].mxu0
      %v1034 = vadd.f32 0.0, %v1033
      %v1035 = vpop.f32.mrb[0].mxu0
      %v1036 = vpop.f32.mrb[0].mxu0
      %v1037 = vadd.f32 0.0, %v1036
      %v1038 = vpop.f32.mrb[0].mxu0
      %1039 = vmatprep.mubr.bf16.mxu0 0
      %1040 = vmatmul.mubr.bf16.gmra.mrb[0].mxu0 %v975
      %v1041 = vpop.f32.mrb[0].mxu0
      %v1042 = vadd.f32 0.0, %v1041
      %v1043 = vpop.f32.mrb[0].mxu0
      %v1044 = vpop.f32.mrb[0].mxu0
      %v1045 = vadd.f32 0.0, %v1044
      %v1046 = vpop.f32.mrb[0].mxu0
      %1047 = vmatprep.mubr.bf16.mxu0 0
      %1048 = vmatmul.mubr.bf16.gmra.mrb[0].mxu0 %v978
      %v1049 = vpop.f32.mrb[0].mxu0
      %v1050 = vadd.f32 0.0, %v1049
      %v1051 = vpop.f32.mrb[0].mxu0
      %v1052 = vpop.f32.mrb[0].mxu0
      %v1053 = vpop.f32.mrb[0].mxu0
      %1054 = vdwg.mxu0
      %v1055 = vadd.f32 %v940, %v1018
      %v1056 = vadd.f32 %v941, %v1021
      %v1057 = vadd.f32 %v942, %v1026
      %v1058 = vadd.f32 %v943, %v1029
      %v1059 = vadd.f32 %v944, %v1034
      %v1060 = vadd.f32 %v945, %v1037
      %v1061 = vadd.f32 %v946, %v1042
      %v1062 = vadd.f32 %v947, %v1045
      %v1063 = vadd.f32 %v948, %v1050
      %v1064 = vadd.f32 %v1055, %v487
      %v1065 = vadd.f32 %v1056, %v487
      %v1066 = vadd.f32 %v1057, %v487
      %v1067 = vadd.f32 %v1058, %v487
      %v1068 = vadd.f32 %v1059, %v487
      %v1069 = vadd.f32 %v1060, %v487
      %v1070 = vadd.f32 %v1061, %v487
      %v1071 = vadd.f32 %v1062, %v487
      %v1072 = vadd.f32 %v1063, %v487
      %1073 = vst.msk [vmem:[#allocation3] sm:$0xff] %vm498, %v1064
      %1074 = vst.msk [vmem:[#allocation3 + $0x8] sm:$0xff] %vm498, %v1065
      %1075 = vst.msk [vmem:[#allocation3 + $0x10] sm:$0xff] %vm498, %v1066
      %1076 = vst.msk [vmem:[#allocation3 + $0x18] sm:$0xff] %vm498, %v1067
      %1077 = vst.msk [vmem:[#allocation3 + $0x20] sm:$0xff] %vm498, %v1068
      %1078 = vst.msk [vmem:[#allocation3 + $0x28] sm:$0xff] %vm498, %v1069
      %1079 = vst.msk [vmem:[#allocation3 + $0x30] sm:$0xff] %vm498, %v1070
      %1080 = vst.msk [vmem:[#allocation3 + $0x38] sm:$0xff] %vm498, %v1071
      %1081 = vst.msk [vmem:[#allocation3 + $0x40] sm:$0xff] %vm498, %v1072
      %v1082 = vld [vmem:[#allocation2] sm:$0xff]
      %v1083 = vld [vmem:[#allocation2 + $0x9] sm:$0xff]
      %v1084 = vld [vmem:[#allocation2 + $0x12] sm:$0xff]
      %v1085 = vld [vmem:[#allocation2 + $0x1b] sm:$0xff]
      %v1086 = vld [vmem:[#allocation2 + $0x24] sm:$0xff]
      %v1087 = vld [vmem:[#allocation2 + $0x2d] sm:$0xff]
      %v1088 = vld [vmem:[#allocation2 + $0x36] sm:$0xff]
      %v1089 = vld [vmem:[#allocation2 + $0x3f] sm:$0xff]
      %v1090 = vld [vmem:[#allocation3] sm:$0xff]
      %v1091 = vld [vmem:[#allocation3 + $0x9] sm:$0xff]
      %v1092 = vld [vmem:[#allocation3 + $0x12] sm:$0xff]
      %v1093 = vld [vmem:[#allocation3 + $0x1b] sm:$0xff]
      %v1094 = vld [vmem:[#allocation3 + $0x24] sm:$0xff]
      %v1095 = vld [vmem:[#allocation3 + $0x2d] sm:$0xff]
      %v1096 = vld [vmem:[#allocation3 + $0x36] sm:$0xff]
      %v1097 = vld [vmem:[#allocation3 + $0x3f] sm:$0xff]
      %1099 = vrot.lane.b32.xlu0 %v1083, 8
      %v1100 = vpop.permute.xlu0 %1099
      %1103 = vrot.lane.b32.xlu0 %v1084, 16
      %v1104 = vpop.permute.xlu0 %1103
      %1107 = vrot.lane.b32.xlu0 %v1085, 24
      %v1108 = vpop.permute.xlu0 %1107
      %1111 = vrot.lane.b32.xlu0 %v1086, 32
      %v1112 = vpop.permute.xlu0 %1111
      %1115 = vrot.lane.b32.xlu0 %v1087, 40
      %v1116 = vpop.permute.xlu0 %1115
      %1119 = vrot.lane.b32.xlu0 %v1088, 48
      %v1120 = vpop.permute.xlu0 %1119
      %1123 = vrot.lane.b32.xlu0 %v1089, 56
      %v1124 = vpop.permute.xlu0 %1123
      %1127 = vrot.lane.b32.xlu0 %v1090, 64
      %v1128 = vpop.permute.xlu0 %1127
      %1131 = vrot.lane.b32.xlu0 %v1091, 72
      %v1132 = vpop.permute.xlu0 %1131
      %1135 = vrot.lane.b32.xlu0 %v1092, 80
      %v1136 = vpop.permute.xlu0 %1135
      %1139 = vrot.lane.b32.xlu0 %v1093, 88
      %v1140 = vpop.permute.xlu0 %1139
      %1143 = vrot.lane.b32.xlu0 %v1094, 96
      %v1144 = vpop.permute.xlu0 %1143
      %1147 = vrot.lane.b32.xlu0 %v1095, 104
      %v1148 = vpop.permute.xlu0 %1147
      %1151 = vrot.lane.b32.xlu0 %v1096, 112
      %v1152 = vpop.permute.xlu0 %1151
      %1155 = vrot.lane.b32.xlu0 %v1097, 120
      %v1156 = vpop.permute.xlu0 %1155
      %v1158 = vsel %vm498, %v1082, %v1100
      %vm1159 = vcmask 130048
      %v1160 = vsel %vm1159, %v1158, %v1104
      %vm1161 = vcmask 195584
      %v1162 = vsel %vm1161, %v1160, %v1108
      %vm1163 = vcmask 261120
      %v1164 = vsel %vm1163, %v1162, %v1112
      %vm1165 = vcmask 326656
      %v1166 = vsel %vm1165, %v1164, %v1116
      %vm1167 = vcmask 392192
      %v1168 = vsel %vm1167, %v1166, %v1120
      %vm1169 = vcmask 457728
      %v1170 = vsel %vm1169, %v1168, %v1124
      %vm1171 = vcmask 523264
      %v1172 = vsel %vm1171, %v1170, %v1128
      %vm1173 = vcmask 588800
      %v1174 = vsel %vm1173, %v1172, %v1132
      %vm1175 = vcmask 654336
      %v1176 = vsel %vm1175, %v1174, %v1136
      %vm1177 = vcmask 719872
      %v1178 = vsel %vm1177, %v1176, %v1140
      %vm1179 = vcmask 785408
      %v1180 = vsel %vm1179, %v1178, %v1144
      %vm1181 = vcmask 850944
      %v1182 = vsel %vm1181, %v1180, %v1148
      %vm1183 = vcmask 916480
      %v1184 = vsel %vm1183, %v1182, %v1152
      %vm1185 = vcmask 982016
      %v1186 = vsel %vm1185, %v1184, %v1156
      %v1187 = vmax.f32 %v1186, 0.0
      %v1188 = vld [vmem:[%s208] sm:$0xff]
      %v1189 = vadd.f32 %v1187, %v1188
      %v1190 = vmax.f32 %v1189, 0.0
      %1191 = vst [vmem:[%s212] sm:$0xff] %v1190
      %p1192 = scmp.lt.s32.totalorder %s15, 1
      %s1193 = scalar_select %p1192, %s15, 1
      %s1194 = smul.addr %s1193, 8
      %s1195 = scalar_lea.vmem %s4, %s1194
      // Predicated region
      $region37: #{deconv_block_sum_forward.1} parent=35 // pred_check
        %p1196 = pneg %p127
      $region38: #{deconv_block_sum_forward.1} parent=35 // pred_check_branch
        %1198 = sbr.rel (%p1196) target = $region40
      $region39: #{deconv_block_sum_forward.1} parent=35 // pred_region
        _
      $region40: #{deconv_block_sum_forward.1} parent=35 // pred_fallthru
        _
    $region36: #{deconv_block_sum_forward.1} parent=5 // pred_fallthru
      _
    %p1199 = scmp.le.s32.totalorder 2, %s10
    // Predicated region
    $region41: #{deconv_block_sum_forward.1} parent=5 // pred_check
      %p1200 = pneg %p1199
    $region42: #{deconv_block_sum_forward.1} parent=5 // pred_check_branch
      %1202 = sbr.rel (%p1200) target = $region44
    $region43: #{deconv_block_sum_forward.1} parent=5 // pred_region
      %s1203 = ssub.s32 %s10, 2
      // Predicated region
      $region45: #{deconv_block_sum_forward.1} parent=43 // pred_check
        %p1204 = pneg %p133
      $region46: #{deconv_block_sum_forward.1} parent=43 // pred_check_branch
        %1206 = sbr.rel (%p1204) target = $region48
      $region47: #{deconv_block_sum_forward.1} parent=43 // pred_region
        %p1207 = scmp.lt.s32.totalorder %s16, 1
        %s1208 = scalar_select %p1207, %s16, 1
        %s1209 = smul.addr %s1208, 8
        %s1210 = scalar_lea.vmem %s4, %s1209
      $region48: #{deconv_block_sum_forward.1} parent=43 // pred_fallthru
        _
    $region44: #{deconv_block_sum_forward.1} parent=5 // pred_fallthru
      _
  $region6: #{deconv_block_sum_forward.1} parent=0 // loop_footer
    %s14 = sadd.s32 1, %s10
  $region7: #{deconv_block_sum_forward.1} parent=0 // loop_footer_branch
    %9 = sbr.rel target = $region3
  $region8: #{deconv_block_sum_forward.1} parent=0 // loop_exit
    _

</llo_original>
